<compile_context>
chip_gen: v6e
topology: v6e:2x2x1
jax: 0.10.0
libtpu: 0.0.40
codegen_flags: <defaults>
</compile_context>

<pallas_src>
import functools
import math

import jax
import jax.numpy as jnp
from jax import lax
from jax.experimental import pallas as pl
from jax.experimental.pallas import tpu as pltpu


def mha_kernel(q_ref, k_ref, v_ref, w_ref, b_ref, o_ref, ctx_ref, *,
               heads_count, d_head):
    # q_ref: (1, TQ, D) f32,  k_ref / v_ref: (1, Lk, D) f32
    # w_ref: (4, D, D) bf16  -> [wq * scale, wk, wv, wo]   (pre-transposed)
    # b_ref: (4, D)   f32    -> [bq * scale, bk, bv, bo]
    # ctx_ref: (TQ, D) bf16 VMEM scratch holding the merged per-head contexts.
    q = q_ref[0].astype(jnp.bfloat16)
    k = k_ref[0].astype(jnp.bfloat16)
    v = v_ref[0].astype(jnp.bfloat16)

    # --- Q / K / V projections: bf16 MXU matmuls, f32 accumulation ---
    qp = (jnp.dot(q, w_ref[0], preferred_element_type=jnp.float32)
          + b_ref[0:1, :]).astype(jnp.bfloat16)
    kp = (jnp.dot(k, w_ref[1], preferred_element_type=jnp.float32)
          + b_ref[1:2, :]).astype(jnp.bfloat16)
    vp = (jnp.dot(v, w_ref[2], preferred_element_type=jnp.float32)
          + b_ref[2:3, :]).astype(jnp.bfloat16)

    # --- per-head scaled dot-product attention (scale folded into wq/bq) ---
    for h in range(heads_count):
        sl = slice(h * d_head, (h + 1) * d_head)
        q_h = qp[:, sl]            # (TQ, d_head) bf16
        k_h = kp[:, sl]            # (Lk, d_head) bf16
        v_h = vp[:, sl]            # (Lk, d_head) bf16

        # scores = q_h @ k_h^T   (already scaled)        -> (TQ, Lk) f32
        scores = lax.dot_general(
            q_h, k_h, (((1,), (1,)), ((), ())),
            preferred_element_type=jnp.float32)

        # softmax over the key axis, f32 math, EUP reciprocal instead of divide
        m = jnp.max(scores, axis=-1, keepdims=True)
        p = jnp.exp(scores - m)
        p = p * pl.reciprocal(jnp.sum(p, axis=-1, keepdims=True), approx=True)

        # dropout is identity in eval mode; write this head's context directly
        # into its lane slice of the scratch (no concat, no live list).
        ctx_ref[:, sl] = jnp.dot(
            p.astype(jnp.bfloat16), v_h,
            preferred_element_type=jnp.float32).astype(jnp.bfloat16)

    # --- final projection: one full-lane matmul + full-lane store ---
    out = (jnp.dot(ctx_ref[...], w_ref[3], preferred_element_type=jnp.float32)
           + b_ref[3:4, :])
    o_ref[0] = out.astype(o_ref.dtype)


def _pick_query_tile(lq):
    for t in (512, 256, 128):
        if lq % t == 0:
            return t
    return lq


def multi_head_attention(query, key, value, params, heads_count):
    """query/key/value: (B, L, d_model) float32. params: dict of transposed
    weights (d_model, d_model) and biases (1, d_model)."""
    B, Lq, D = query.shape
    _, Lk, _ = key.shape
    _, Lv, _ = value.shape
    assert D % heads_count == 0
    assert Lk == Lv
    d_head = D // heads_count
    scale = 1.0 / math.sqrt(d_head)

    # Fold 1/sqrt(d_head) into the query projection at trace time; stack the
    # four weights / biases into single grid-invariant streams; weights bf16.
    w_stack = jnp.stack(
        [params["wq"] * scale, params["wk"], params["wv"], params["wo"]],
        axis=0).astype(jnp.bfloat16)                           # (4, D, D)
    b_stack = jnp.concatenate(
        [params["bq"] * scale, params["bk"], params["bv"], params["bo"]],
        axis=0).astype(jnp.float32)                            # (4, D)

    tq = _pick_query_tile(Lq)
    grid = (B, Lq // tq)

    kernel = functools.partial(mha_kernel, heads_count=heads_count,
                               d_head=d_head)

    grid_spec = pltpu.PrefetchScalarGridSpec(
        num_scalar_prefetch=0,
        grid=grid,
        in_specs=[
            pl.BlockSpec((1, tq, D), lambda b, qt: (b, qt, 0)),   # query tile
            pl.BlockSpec((1, Lk, D), lambda b, qt: (b, 0, 0)),    # key (full)
            pl.BlockSpec((1, Lk, D), lambda b, qt: (b, 0, 0)),    # value (full)
            pl.BlockSpec((4, D, D), lambda b, qt: (0, 0, 0)),     # weights (grid-invariant)
            pl.BlockSpec((4, D), lambda b, qt: (0, 0)),           # biases (grid-invariant)
        ],
        out_specs=pl.BlockSpec((1, tq, D), lambda b, qt: (b, qt, 0)),
        scratch_shapes=[pltpu.VMEM((tq, D), jnp.bfloat16)],
    )

    return pl.pallas_call(
        kernel,
        out_shape=jax.ShapeDtypeStruct((B, Lq, D), query.dtype),
        grid_spec=grid_spec,
        compiler_params=pltpu.CompilerParams(
            dimension_semantics=("parallel", "parallel")),
    )(query, key, value, w_stack, b_stack)


def mha_reference(query, key, value, params, heads_count):
    """Pure-JAX f32 reference mirroring the PyTorch forward (eval mode)."""
    B, Lq, D = query.shape
    d_head = D // heads_count

    def proj(x, w, b):
        return x @ w + b  # w already transposed to (D, D)

    qp = proj(query, params["wq"], params["bq"])
    kp = proj(key, params["wk"], params["bk"])
    vp = proj(value, params["wv"], params["bv"])

    def heads(x):
        B_, L, _ = x.shape
        return x.reshape(B_, L, heads_count, d_head).transpose(0, 2, 1, 3)

    qh, kh, vh = heads(qp), heads(kp), heads(vp)
    scores = jnp.einsum("bhqd,bhkd->bhqk", qh, kh) / jnp.sqrt(
        jnp.asarray(d_head, jnp.float32))
    attn = jax.nn.softmax(scores, axis=-1)
    ctx = jnp.einsum("bhqk,bhkd->bhqd", attn, vh)
    ctx = ctx.transpose(0, 2, 1, 3).reshape(B, Lq, D)
    return proj(ctx, params["wo"], params["bo"])


def init_params(key, d_model):
    """Deterministic nn.Linear-style init: U(-1/sqrt(fan_in), 1/sqrt(fan_in)).
    Weights stored pre-transposed as (d_in, d_out); biases as (1, d_out)."""
    bound = 1.0 / jnp.sqrt(jnp.asarray(d_model, jnp.float32))
    names = ["wq", "bq", "wk", "bk", "wv", "bv", "wo", "bo"]
    keys = jax.random.split(key, len(names))
    params = {}
    for n, k in zip(names, keys):
        if n.startswith("w"):
            params[n] = jax.random.uniform(
                k, (d_model, d_model), jnp.float32, -bound, bound)
        else:
            params[n] = jax.random.uniform(
                k, (1, d_model), jnp.float32, -bound, bound)
    return params


if __name__ == "__main__":
    heads_count = 4
    d_model = 32
    batch = 2
    seq = 8
    # dropout_prob is irrelevant in eval mode (identity).

    root = jax.random.PRNGKey(0)
    k_q, k_k, k_v, k_p = jax.random.split(root, 4)
    query = jax.random.normal(k_q, (batch, seq, d_model), jnp.float32)
    key = jax.random.normal(k_k, (batch, seq, d_model), jnp.float32)
    value = jax.random.normal(k_v, (batch, seq, d_model), jnp.float32)
    params = init_params(k_p, d_model)

    out = multi_head_attention(query, key, value, params, heads_count)
    out = jax.block_until_ready(out)

    ref = mha_reference(query, key, value, params, heads_count)
    assert out.shape == (batch, seq, d_model)
    # bf16 MXU inputs + approximate reciprocal -> loosened tolerance vs f32 ref.
    assert jnp.allclose(out, ref, atol=5e-2, rtol=5e-2), \
        f"max abs err = {jnp.max(jnp.abs(out - ref))}"

    print("KERNEL_OK")
</pallas_src>

<mosaic_0001>
module attributes {stable_mosaic.version = 11 : i64} {
  func.func @mha_kernel(%arg0: i32, %arg1: i32, %arg2: memref<1x8x32xf32, #tpu.memory_space<vmem>>, %arg3: memref<1x8x32xf32, #tpu.memory_space<vmem>>, %arg4: memref<1x8x32xf32, #tpu.memory_space<vmem>>, %arg5: memref<4x32x32xbf16, #tpu.memory_space<vmem>>, %arg6: memref<4x32xf32, #tpu.memory_space<vmem>>, %arg7: memref<1x8x32xf32, #tpu.memory_space<vmem>>, %arg8: memref<8x32xbf16, #tpu.memory_space<vmem>>) attributes {dimension_semantics = [#tpu.dimension_semantics<parallel>, #tpu.dimension_semantics<parallel>], iteration_bounds = array<i64: 2, 1>, scalar_prefetch = 0 : i64, scratch_operands = 1 : i64, tpu.core_type = #tpu.core_type<tc>, window_params = [{transform_indices = @transform_0, window_bounds = array<i64: 1, 8, 32>}, {transform_indices = @transform_1, window_bounds = array<i64: 1, 8, 32>}, {transform_indices = @transform_2, window_bounds = array<i64: 1, 8, 32>}, {pipeline_mode = #tpu.pipeline_mode<synchronous>, transform_indices = @transform_3, window_bounds = array<i64: 4, 32, 32>}, {pipeline_mode = #tpu.pipeline_mode<synchronous>, transform_indices = @transform_4, window_bounds = array<i64: 4, 32>}, {transform_indices = @transform_5, window_bounds = array<i64: 1, 8, 32>}]} {
    %c0 = arith.constant 0 : index
    %c0_0 = arith.constant 0 : index
    %c0_1 = arith.constant 0 : index
    %0 = vector.load %arg2[%c0, %c0_0, %c0_1] : memref<1x8x32xf32, #tpu.memory_space<vmem>>, vector<1x8x32xf32>
    %1 = vector.shape_cast %0 : vector<1x8x32xf32> to vector<8x32xf32>
    %2 = arith.truncf %1 : vector<8x32xf32> to vector<8x32xbf16>
    %c0_2 = arith.constant 0 : index
    %c0_3 = arith.constant 0 : index
    %c0_4 = arith.constant 0 : index
    %3 = vector.load %arg3[%c0_2, %c0_3, %c0_4] : memref<1x8x32xf32, #tpu.memory_space<vmem>>, vector<1x8x32xf32>
    %4 = vector.shape_cast %3 : vector<1x8x32xf32> to vector<8x32xf32>
    %5 = arith.truncf %4 : vector<8x32xf32> to vector<8x32xbf16>
    %c0_5 = arith.constant 0 : index
    %c0_6 = arith.constant 0 : index
    %c0_7 = arith.constant 0 : index
    %6 = vector.load %arg4[%c0_5, %c0_6, %c0_7] : memref<1x8x32xf32, #tpu.memory_space<vmem>>, vector<1x8x32xf32>
    %7 = vector.shape_cast %6 : vector<1x8x32xf32> to vector<8x32xf32>
    %8 = arith.truncf %7 : vector<8x32xf32> to vector<8x32xbf16>
    %c0_8 = arith.constant 0 : index
    %c0_9 = arith.constant 0 : index
    %c0_10 = arith.constant 0 : index
    %9 = vector.load %arg5[%c0_8, %c0_9, %c0_10] : memref<4x32x32xbf16, #tpu.memory_space<vmem>>, vector<1x32x32xbf16>
    %10 = vector.shape_cast %9 : vector<1x32x32xbf16> to vector<32x32xbf16>
    %cst = arith.constant dense<0.000000e+00> : vector<8x32xf32>
    %11 = tpu.matmul %2, %10, %cst {dimension_numbers = #tpu.dot_dimension_numbers<[1], [0], [0], [1], [0, 0, 1, 1], [], []>} : vector<8x32xbf16>, vector<32x32xbf16>, vector<8x32xf32> -> vector<8x32xf32>
    %c0_11 = arith.constant 0 : index
    %c0_12 = arith.constant 0 : index
    %12 = vector.load %arg6[%c0_11, %c0_12] : memref<4x32xf32, #tpu.memory_space<vmem>>, vector<1x32xf32>
    %13 = vector.broadcast %12 : vector<1x32xf32> to vector<8x32xf32>
    %14 = arith.addf %11, %13 : vector<8x32xf32>
    %15 = arith.truncf %14 : vector<8x32xf32> to vector<8x32xbf16>
    %c1 = arith.constant 1 : index
    %c0_13 = arith.constant 0 : index
    %c0_14 = arith.constant 0 : index
    %16 = vector.load %arg5[%c1, %c0_13, %c0_14] : memref<4x32x32xbf16, #tpu.memory_space<vmem>>, vector<1x32x32xbf16>
    %17 = vector.shape_cast %16 : vector<1x32x32xbf16> to vector<32x32xbf16>
    %cst_15 = arith.constant dense<0.000000e+00> : vector<8x32xf32>
    %18 = tpu.matmul %5, %17, %cst_15 {dimension_numbers = #tpu.dot_dimension_numbers<[1], [0], [0], [1], [0, 0, 1, 1], [], []>} : vector<8x32xbf16>, vector<32x32xbf16>, vector<8x32xf32> -> vector<8x32xf32>
    %c1_16 = arith.constant 1 : index
    %c0_17 = arith.constant 0 : index
    %19 = vector.load %arg6[%c1_16, %c0_17] : memref<4x32xf32, #tpu.memory_space<vmem>>, vector<1x32xf32>
    %20 = vector.broadcast %19 : vector<1x32xf32> to vector<8x32xf32>
    %21 = arith.addf %18, %20 : vector<8x32xf32>
    %22 = arith.truncf %21 : vector<8x32xf32> to vector<8x32xbf16>
    %c2 = arith.constant 2 : index
    %c0_18 = arith.constant 0 : index
    %c0_19 = arith.constant 0 : index
    %23 = vector.load %arg5[%c2, %c0_18, %c0_19] : memref<4x32x32xbf16, #tpu.memory_space<vmem>>, vector<1x32x32xbf16>
    %24 = vector.shape_cast %23 : vector<1x32x32xbf16> to vector<32x32xbf16>
    %cst_20 = arith.constant dense<0.000000e+00> : vector<8x32xf32>
    %25 = tpu.matmul %8, %24, %cst_20 {dimension_numbers = #tpu.dot_dimension_numbers<[1], [0], [0], [1], [0, 0, 1, 1], [], []>} : vector<8x32xbf16>, vector<32x32xbf16>, vector<8x32xf32> -> vector<8x32xf32>
    %c2_21 = arith.constant 2 : index
    %c0_22 = arith.constant 0 : index
    %26 = vector.load %arg6[%c2_21, %c0_22] : memref<4x32xf32, #tpu.memory_space<vmem>>, vector<1x32xf32>
    %27 = vector.broadcast %26 : vector<1x32xf32> to vector<8x32xf32>
    %28 = arith.addf %25, %27 : vector<8x32xf32>
    %29 = arith.truncf %28 : vector<8x32xf32> to vector<8x32xbf16>
    %30 = vector.extract_strided_slice %15 {offsets = [0, 0], sizes = [8, 8], strides = [1, 1]} : vector<8x32xbf16> to vector<8x8xbf16>
    %31 = vector.extract_strided_slice %22 {offsets = [0, 0], sizes = [8, 8], strides = [1, 1]} : vector<8x32xbf16> to vector<8x8xbf16>
    %32 = vector.extract_strided_slice %29 {offsets = [0, 0], sizes = [8, 8], strides = [1, 1]} : vector<8x32xbf16> to vector<8x8xbf16>
    %cst_23 = arith.constant dense<0.000000e+00> : vector<8x8xf32>
    %33 = tpu.matmul %30, %31, %cst_23 {dimension_numbers = #tpu.dot_dimension_numbers<[1], [1], [0], [0], [0, 0, 1, 0], [], []>} : vector<8x8xbf16>, vector<8x8xbf16>, vector<8x8xf32> -> vector<8x8xf32>
    %cst_24 = arith.constant dense<0xFF800000> : vector<8xf32>
    %34 = vector.multi_reduction <maximumf>, %33, %cst_24 [1] : vector<8x8xf32> to vector<8xf32>
    %35 = vector.shape_cast %34 : vector<8xf32> to vector<8x1xf32>
    %36 = vector.broadcast %35 : vector<8x1xf32> to vector<8x8xf32>
    %37 = arith.subf %33, %36 : vector<8x8xf32>
    %38 = math.exp %37 : vector<8x8xf32>
    %cst_25 = arith.constant dense<0.000000e+00> : vector<8xf32>
    %39 = vector.multi_reduction <add>, %38, %cst_25 [1] : vector<8x8xf32> to vector<8xf32>
    %40 = vector.shape_cast %39 : vector<8xf32> to vector<8x1xf32>
    %41 = tpu.reciprocal %40 {approx = true} : vector<8x1xf32> -> vector<8x1xf32>
    %42 = vector.broadcast %41 : vector<8x1xf32> to vector<8x8xf32>
    %43 = arith.mulf %38, %42 : vector<8x8xf32>
    %44 = arith.truncf %43 : vector<8x8xf32> to vector<8x8xbf16>
    %cst_26 = arith.constant dense<0.000000e+00> : vector<8x8xf32>
    %45 = tpu.matmul %44, %32, %cst_26 {dimension_numbers = #tpu.dot_dimension_numbers<[1], [0], [0], [1], [0, 0, 1, 1], [], []>} : vector<8x8xbf16>, vector<8x8xbf16>, vector<8x8xf32> -> vector<8x8xf32>
    %46 = arith.truncf %45 : vector<8x8xf32> to vector<8x8xbf16>
    %c0_27 = arith.constant 0 : index
    %c0_28 = arith.constant 0 : index
    %47 = vector.load %arg8[%c0_27, %c0_28] : memref<8x32xbf16, #tpu.memory_space<vmem>>, vector<8x8xbf16>
    tpu.vector_store %arg8[%c0_27, %c0_28], %46 {strides = array<i32>} : memref<8x32xbf16, #tpu.memory_space<vmem>>, vector<8x8xbf16>,
    %48 = vector.extract_strided_slice %15 {offsets = [0, 8], sizes = [8, 8], strides = [1, 1]} : vector<8x32xbf16> to vector<8x8xbf16>
    %49 = vector.extract_strided_slice %22 {offsets = [0, 8], sizes = [8, 8], strides = [1, 1]} : vector<8x32xbf16> to vector<8x8xbf16>
    %50 = vector.extract_strided_slice %29 {offsets = [0, 8], sizes = [8, 8], strides = [1, 1]} : vector<8x32xbf16> to vector<8x8xbf16>
    %cst_29 = arith.constant dense<0.000000e+00> : vector<8x8xf32>
    %51 = tpu.matmul %48, %49, %cst_29 {dimension_numbers = #tpu.dot_dimension_numbers<[1], [1], [0], [0], [0, 0, 1, 0], [], []>} : vector<8x8xbf16>, vector<8x8xbf16>, vector<8x8xf32> -> vector<8x8xf32>
    %cst_30 = arith.constant dense<0xFF800000> : vector<8xf32>
    %52 = vector.multi_reduction <maximumf>, %51, %cst_30 [1] : vector<8x8xf32> to vector<8xf32>
    %53 = vector.shape_cast %52 : vector<8xf32> to vector<8x1xf32>
    %54 = vector.broadcast %53 : vector<8x1xf32> to vector<8x8xf32>
    %55 = arith.subf %51, %54 : vector<8x8xf32>
    %56 = math.exp %55 : vector<8x8xf32>
    %cst_31 = arith.constant dense<0.000000e+00> : vector<8xf32>
    %57 = vector.multi_reduction <add>, %56, %cst_31 [1] : vector<8x8xf32> to vector<8xf32>
    %58 = vector.shape_cast %57 : vector<8xf32> to vector<8x1xf32>
    %59 = tpu.reciprocal %58 {approx = true} : vector<8x1xf32> -> vector<8x1xf32>
    %60 = vector.broadcast %59 : vector<8x1xf32> to vector<8x8xf32>
    %61 = arith.mulf %56, %60 : vector<8x8xf32>
    %62 = arith.truncf %61 : vector<8x8xf32> to vector<8x8xbf16>
    %cst_32 = arith.constant dense<0.000000e+00> : vector<8x8xf32>
    %63 = tpu.matmul %62, %50, %cst_32 {dimension_numbers = #tpu.dot_dimension_numbers<[1], [0], [0], [1], [0, 0, 1, 1], [], []>} : vector<8x8xbf16>, vector<8x8xbf16>, vector<8x8xf32> -> vector<8x8xf32>
    %64 = arith.truncf %63 : vector<8x8xf32> to vector<8x8xbf16>
    %c0_33 = arith.constant 0 : index
    %c8 = arith.constant 8 : index
    %65 = vector.load %arg8[%c0_33, %c8] : memref<8x32xbf16, #tpu.memory_space<vmem>>, vector<8x8xbf16>
    tpu.vector_store %arg8[%c0_33, %c8], %64 {strides = array<i32>} : memref<8x32xbf16, #tpu.memory_space<vmem>>, vector<8x8xbf16>,
    %66 = vector.extract_strided_slice %15 {offsets = [0, 16], sizes = [8, 8], strides = [1, 1]} : vector<8x32xbf16> to vector<8x8xbf16>
    %67 = vector.extract_strided_slice %22 {offsets = [0, 16], sizes = [8, 8], strides = [1, 1]} : vector<8x32xbf16> to vector<8x8xbf16>
    %68 = vector.extract_strided_slice %29 {offsets = [0, 16], sizes = [8, 8], strides = [1, 1]} : vector<8x32xbf16> to vector<8x8xbf16>
    %cst_34 = arith.constant dense<0.000000e+00> : vector<8x8xf32>
    %69 = tpu.matmul %66, %67, %cst_34 {dimension_numbers = #tpu.dot_dimension_numbers<[1], [1], [0], [0], [0, 0, 1, 0], [], []>} : vector<8x8xbf16>, vector<8x8xbf16>, vector<8x8xf32> -> vector<8x8xf32>
    %cst_35 = arith.constant dense<0xFF800000> : vector<8xf32>
    %70 = vector.multi_reduction <maximumf>, %69, %cst_35 [1] : vector<8x8xf32> to vector<8xf32>
    %71 = vector.shape_cast %70 : vector<8xf32> to vector<8x1xf32>
    %72 = vector.broadcast %71 : vector<8x1xf32> to vector<8x8xf32>
    %73 = arith.subf %69, %72 : vector<8x8xf32>
    %74 = math.exp %73 : vector<8x8xf32>
    %cst_36 = arith.constant dense<0.000000e+00> : vector<8xf32>
    %75 = vector.multi_reduction <add>, %74, %cst_36 [1] : vector<8x8xf32> to vector<8xf32>
    %76 = vector.shape_cast %75 : vector<8xf32> to vector<8x1xf32>
    %77 = tpu.reciprocal %76 {approx = true} : vector<8x1xf32> -> vector<8x1xf32>
    %78 = vector.broadcast %77 : vector<8x1xf32> to vector<8x8xf32>
    %79 = arith.mulf %74, %78 : vector<8x8xf32>
    %80 = arith.truncf %79 : vector<8x8xf32> to vector<8x8xbf16>
    %cst_37 = arith.constant dense<0.000000e+00> : vector<8x8xf32>
    %81 = tpu.matmul %80, %68, %cst_37 {dimension_numbers = #tpu.dot_dimension_numbers<[1], [0], [0], [1], [0, 0, 1, 1], [], []>} : vector<8x8xbf16>, vector<8x8xbf16>, vector<8x8xf32> -> vector<8x8xf32>
    %82 = arith.truncf %81 : vector<8x8xf32> to vector<8x8xbf16>
    %c0_38 = arith.constant 0 : index
    %c16 = arith.constant 16 : index
    %83 = vector.load %arg8[%c0_38, %c16] : memref<8x32xbf16, #tpu.memory_space<vmem>>, vector<8x8xbf16>
    tpu.vector_store %arg8[%c0_38, %c16], %82 {strides = array<i32>} : memref<8x32xbf16, #tpu.memory_space<vmem>>, vector<8x8xbf16>,
    %84 = vector.extract_strided_slice %15 {offsets = [0, 24], sizes = [8, 8], strides = [1, 1]} : vector<8x32xbf16> to vector<8x8xbf16>
    %85 = vector.extract_strided_slice %22 {offsets = [0, 24], sizes = [8, 8], strides = [1, 1]} : vector<8x32xbf16> to vector<8x8xbf16>
    %86 = vector.extract_strided_slice %29 {offsets = [0, 24], sizes = [8, 8], strides = [1, 1]} : vector<8x32xbf16> to vector<8x8xbf16>
    %cst_39 = arith.constant dense<0.000000e+00> : vector<8x8xf32>
    %87 = tpu.matmul %84, %85, %cst_39 {dimension_numbers = #tpu.dot_dimension_numbers<[1], [1], [0], [0], [0, 0, 1, 0], [], []>} : vector<8x8xbf16>, vector<8x8xbf16>, vector<8x8xf32> -> vector<8x8xf32>
    %cst_40 = arith.constant dense<0xFF800000> : vector<8xf32>
    %88 = vector.multi_reduction <maximumf>, %87, %cst_40 [1] : vector<8x8xf32> to vector<8xf32>
    %89 = vector.shape_cast %88 : vector<8xf32> to vector<8x1xf32>
    %90 = vector.broadcast %89 : vector<8x1xf32> to vector<8x8xf32>
    %91 = arith.subf %87, %90 : vector<8x8xf32>
    %92 = math.exp %91 : vector<8x8xf32>
    %cst_41 = arith.constant dense<0.000000e+00> : vector<8xf32>
    %93 = vector.multi_reduction <add>, %92, %cst_41 [1] : vector<8x8xf32> to vector<8xf32>
    %94 = vector.shape_cast %93 : vector<8xf32> to vector<8x1xf32>
    %95 = tpu.reciprocal %94 {approx = true} : vector<8x1xf32> -> vector<8x1xf32>
    %96 = vector.broadcast %95 : vector<8x1xf32> to vector<8x8xf32>
    %97 = arith.mulf %92, %96 : vector<8x8xf32>
    %98 = arith.truncf %97 : vector<8x8xf32> to vector<8x8xbf16>
    %cst_42 = arith.constant dense<0.000000e+00> : vector<8x8xf32>
    %99 = tpu.matmul %98, %86, %cst_42 {dimension_numbers = #tpu.dot_dimension_numbers<[1], [0], [0], [1], [0, 0, 1, 1], [], []>} : vector<8x8xbf16>, vector<8x8xbf16>, vector<8x8xf32> -> vector<8x8xf32>
    %100 = arith.truncf %99 : vector<8x8xf32> to vector<8x8xbf16>
    %c0_43 = arith.constant 0 : index
    %c24 = arith.constant 24 : index
    %101 = vector.load %arg8[%c0_43, %c24] : memref<8x32xbf16, #tpu.memory_space<vmem>>, vector<8x8xbf16>
    tpu.vector_store %arg8[%c0_43, %c24], %100 {strides = array<i32>} : memref<8x32xbf16, #tpu.memory_space<vmem>>, vector<8x8xbf16>,
    %c0_44 = arith.constant 0 : index
    %c0_45 = arith.constant 0 : index
    %102 = vector.load %arg8[%c0_44, %c0_45] : memref<8x32xbf16, #tpu.memory_space<vmem>>, vector<8x32xbf16>
    %c3 = arith.constant 3 : index
    %c0_46 = arith.constant 0 : index
    %c0_47 = arith.constant 0 : index
    %103 = vector.load %arg5[%c3, %c0_46, %c0_47] : memref<4x32x32xbf16, #tpu.memory_space<vmem>>, vector<1x32x32xbf16>
    %104 = vector.shape_cast %103 : vector<1x32x32xbf16> to vector<32x32xbf16>
    %cst_48 = arith.constant dense<0.000000e+00> : vector<8x32xf32>
    %105 = tpu.matmul %102, %104, %cst_48 {dimension_numbers = #tpu.dot_dimension_numbers<[1], [0], [0], [1], [0, 0, 1, 1], [], []>} : vector<8x32xbf16>, vector<32x32xbf16>, vector<8x32xf32> -> vector<8x32xf32>
    %c3_49 = arith.constant 3 : index
    %c0_50 = arith.constant 0 : index
    %106 = vector.load %arg6[%c3_49, %c0_50] : memref<4x32xf32, #tpu.memory_space<vmem>>, vector<1x32xf32>
    %107 = vector.broadcast %106 : vector<1x32xf32> to vector<8x32xf32>
    %108 = arith.addf %105, %107 : vector<8x32xf32>
    %c0_51 = arith.constant 0 : index
    %c0_52 = arith.constant 0 : index
    %c0_53 = arith.constant 0 : index
    %109 = vector.load %arg7[%c0_51, %c0_52, %c0_53] : memref<1x8x32xf32, #tpu.memory_space<vmem>>, vector<1x8x32xf32>
    %110 = vector.shape_cast %109 : vector<1x8x32xf32> to vector<8x32xf32>
    %111 = vector.shape_cast %108 : vector<8x32xf32> to vector<1x8x32xf32>
    tpu.vector_store %arg7[%c0_51, %c0_52, %c0_53], %111 {strides = array<i32>} : memref<1x8x32xf32, #tpu.memory_space<vmem>>, vector<1x8x32xf32>,
    return
  }
  func.func @transform_0(%arg0: i32, %arg1: i32) -> (i32, i32, i32) {
    %c0_i32 = arith.constant 0 : i32
    %c0_i32_0 = arith.constant 0 : i32
    return %arg0, %arg1, %c0_i32 : i32, i32, i32
  }
  func.func @transform_1(%arg0: i32, %arg1: i32) -> (i32, i32, i32) {
    %c0_i32 = arith.constant 0 : i32
    %c0_i32_0 = arith.constant 0 : i32
    %c0_i32_1 = arith.constant 0 : i32
    return %arg0, %c0_i32, %c0_i32_0 : i32, i32, i32
  }
  func.func @transform_2(%arg0: i32, %arg1: i32) -> (i32, i32, i32) {
    %c0_i32 = arith.constant 0 : i32
    %c0_i32_0 = arith.constant 0 : i32
    %c0_i32_1 = arith.constant 0 : i32
    return %arg0, %c0_i32, %c0_i32_0 : i32, i32, i32
  }
  func.func @transform_3(%arg0: i32, %arg1: i32) -> (i32, i32, i32) {
    %c0_i32 = arith.constant 0 : i32
    %c0_i32_0 = arith.constant 0 : i32
    %c0_i32_1 = arith.constant 0 : i32
    %c0_i32_2 = arith.constant 0 : i32
    return %c0_i32, %c0_i32_0, %c0_i32_1 : i32, i32, i32
  }
  func.func @transform_4(%arg0: i32, %arg1: i32) -> (i32, i32) {
    %c0_i32 = arith.constant 0 : i32
    %c0_i32_0 = arith.constant 0 : i32
    %c0_i32_1 = arith.constant 0 : i32
    return %c0_i32, %c0_i32_0 : i32, i32
  }
  func.func @transform_5(%arg0: i32, %arg1: i32) -> (i32, i32, i32) {
    %c0_i32 = arith.constant 0 : i32
    %c0_i32_0 = arith.constant 0 : i32
    return %arg0, %arg1, %c0_i32 : i32, i32, i32
  }
}

</mosaic_0001>

<llo_original>
// kernel: tpu_custom_call.1
$region0: #{tpu_custom_call.1}
  #allocation0 [shape = 'u32[]', space=smem, size = 0x4, offset = 0x4, fixed_abs, tag = 'smem constant byte address 0x4 - core index']
  #allocation1 [shape = 'u32[144,128]{1,0:T(1,128)}', space=vmem, size = 0x12000, scoped, tag = 'internal scratch']
  #allocation2 [shape = 'bf16[8,32]{1,0:T(8,128)(2,1)}', space=vmem, size = 0x800, scoped, tag = 'scratch operand']
  %s0 = inlined_call_operand.hbm [shape: f32[2,8,32], index: 0, kind: input, shape index: {}]
  %s1 = inlined_call_operand.hbm [shape: f32[2,8,32], index: 1, kind: input, shape index: {}]
  %s2 = inlined_call_operand.hbm [shape: f32[2,8,32], index: 2, kind: input, shape index: {}]
  %s3 = inlined_call_operand.hbm [shape: bf16[4,32,32], index: 3, kind: input, shape index: {}]
  %s4 = inlined_call_operand.vmem [shape: f32[4,32], index: 4, kind: input, shape index: {}]
  %s5 = inlined_call_operand.hbm [shape: f32[2,8,32], index: 5, kind: output, shape index: {}]
  %s6 = sld [smem:[#allocation0]]
  $region69: #{tpu_custom_call.1} parent=0
    _
  %s8 = ssub.s32 1, %s6
  %s9 = scalar_select 0, %s8, %s6
  $region1: #{tpu_custom_call.1} parent=0
    #allocation3 [shape = 'u8[8192]{0}', space=vmem, size = 0x2000, scoped, tag = 'input window, operand 0']
    #allocation4 [shape = 's32[2]{0}', space=sflag, size = 0x8, scoped, tag = 'scoped memory for tpu_custom_call.1']
    #allocation5 [shape = 's32[2]{0}', space=sflag, size = 0x8, scoped, tag = 'scoped memory for tpu_custom_call.1']
    #allocation6 [shape = 'u8[8192]{0}', space=vmem, size = 0x2000, scoped, tag = 'input window, operand 1']
    #allocation7 [shape = 's32[2]{0}', space=sflag, size = 0x8, scoped, tag = 'scoped memory for tpu_custom_call.1']
    #allocation8 [shape = 'u8[8192]{0}', space=vmem, size = 0x2000, scoped, tag = 'input window, operand 2']
    #allocation9 [shape = 'u8[32768]{0}', space=vmem, size = 0x8000, scoped, tag = 'input window, operand 3, single buffered']
    #allocation10 [shape = 's32[1]{0}', space=sflag, size = 0x4, scoped, tag = 'scoped memory for tpu_custom_call.1']
    #allocation11 [shape = 'u8[8192]{0}', space=vmem, size = 0x2000, scoped, tag = 'output window, operand 0']
    %10 = vsyncpa [#allocation4], 0
    %s11 = scalar_lea.sflag [#allocation4], 1
    %12 = vsyncpa %s11, 0
    %13 = vsyncpa [#allocation7], 0
    %s14 = scalar_lea.sflag [#allocation7], 1
    %15 = vsyncpa %s14, 0
    %16 = vsyncpa [#allocation10], 0
    %17 = vsyncpa [#allocation5], 0
    %s18 = scalar_lea.sflag [#allocation5], 1
    %19 = vsyncpa %s18, 0
    loop: start=0, step=1, limit=4
    $region2: #{tpu_custom_call.1} parent=1 // loop_pre_header
      _
    $region3: #{tpu_custom_call.1} parent=1 // loop_header
      %s21 = sphi 0, %s25
      %p22 = scmp.ge.s32.totalorder %s21, 4
      %s28 = sphi 0, %s40
      %s29 = sphi 0, %s36
      %s30 = sphi 0, %s28
      %s31 = sphi 0, %s29
      %s32 = sphi 0, %s30
      %s33 = sphi 0, %s31
      %s45 = sphi 0, %s47
      %s48 = sphi 0, %s45
      %s49 = sphi 0, %s48
      %s65 = sphi 0, %s49
      %s71 = sphi 0, %s73
      %s74 = sphi 0, %s71
      %s75 = sphi 0, %s74
      %s91 = sphi 0, %s75
      %s97 = sphi 0, %s99
      %s100 = sphi 0, %s97
      %s101 = sphi 0, %s100
      %s117 = sphi 0, %s101
      %s121 = sphi 0, %s121
      %s123 = sphi 0, %s121
      %s124 = sphi 0, %s123
      %s138 = sphi 0, %s124
      %s142 = sphi 0, %s142
      %s144 = sphi 0, %s142
      %s145 = sphi 0, %s144
      %s159 = sphi 0, %s145
      %s167 = sphi 0, %s169
      %s170 = sphi 0, %s167
      %s171 = sphi 0, %s170
      %s187 = sphi 0, %s171
    $region4: #{tpu_custom_call.1} parent=1 // loop_header_branch
      %24 = sbr.rel (%p22) target = $region8
    $region5: #{tpu_custom_call.1} parent=1 // loop_body
      %s26 = ssub.s32 %s21, 1
      %s27 = ssub.s32 %s21, 2
      %s34 = sadd.s32 1, %s29
      %p35 = scmp.ge.s32.totalorder %s34, 1
      %s36 = scalar_select %p35, 0, %s34
      %s37 = sadd.s32 1, %s28
      %s38 = scalar_select %p35, %s37, %s28
      %p39 = scmp.ge.s32.totalorder %s38, 2
      %s40 = scalar_select %p39, 0, %s38
      %s41 = ssub.s32 %s28, %s40
      %s42 = ssub.s32 %s29, %s36
      %s43 = sor.u32 %s41, %s42
      %p44 = scmp.eq.s32.totalorder %s43, 0
      %s46 = sadd.s32 %s45, 1
      %s47 = scalar_select %p44, %s45, %s46
      %p50 = pneg %p44
      %p51 = scmp.eq.s32.totalorder %s21, 1
      %p52 = por %p50, %p51
      %p53 = scmp.ne.s32.totalorder %s45, %s48
      %p54 = scmp.eq.s32.totalorder %s21, 0
      %p55 = por %p53, %p54
      %p56 = scmp.ne.s32.totalorder %s45, %s48
      %p57 = scmp.eq.s32.totalorder %s26, 1
      %p58 = por %p56, %p57
      %p59 = scmp.ne.s32.totalorder %s48, %s49
      %p60 = scmp.eq.s32.totalorder %s26, 0
      %p61 = por %p59, %p60
      %p62 = scmp.ne.s32.totalorder %s48, %s49
      %p63 = scmp.eq.s32.totalorder %s27, 1
      %p64 = por %p62, %p63
      %p66 = scmp.ne.s32.totalorder %s49, %s65
      %p67 = scmp.eq.s32.totalorder %s27, 0
      %p68 = por %p66, %p67
      %s69 = ssub.s32 %s28, %s40
      %p70 = scmp.eq.s32.totalorder %s69, 0
      %s72 = sadd.s32 %s71, 1
      %s73 = scalar_select %p70, %s71, %s72
      %p76 = pneg %p70
      %p77 = scmp.eq.s32.totalorder %s21, 1
      %p78 = por %p76, %p77
      %p79 = scmp.ne.s32.totalorder %s71, %s74
      %p80 = scmp.eq.s32.totalorder %s21, 0
      %p81 = por %p79, %p80
      %p82 = scmp.ne.s32.totalorder %s71, %s74
      %p83 = scmp.eq.s32.totalorder %s26, 1
      %p84 = por %p82, %p83
      %p85 = scmp.ne.s32.totalorder %s74, %s75
      %p86 = scmp.eq.s32.totalorder %s26, 0
      %p87 = por %p85, %p86
      %p88 = scmp.ne.s32.totalorder %s74, %s75
      %p89 = scmp.eq.s32.totalorder %s27, 1
      %p90 = por %p88, %p89
      %p92 = scmp.ne.s32.totalorder %s75, %s91
      %p93 = scmp.eq.s32.totalorder %s27, 0
      %p94 = por %p92, %p93
      %s95 = ssub.s32 %s28, %s40
      %p96 = scmp.eq.s32.totalorder %s95, 0
      %s98 = sadd.s32 %s97, 1
      %s99 = scalar_select %p96, %s97, %s98
      %p102 = pneg %p96
      %p103 = scmp.eq.s32.totalorder %s21, 1
      %p104 = por %p102, %p103
      %p105 = scmp.ne.s32.totalorder %s97, %s100
      %p106 = scmp.eq.s32.totalorder %s21, 0
      %p107 = por %p105, %p106
      %p108 = scmp.ne.s32.totalorder %s97, %s100
      %p109 = scmp.eq.s32.totalorder %s26, 1
      %p110 = por %p108, %p109
      %p111 = scmp.ne.s32.totalorder %s100, %s101
      %p112 = scmp.eq.s32.totalorder %s26, 0
      %p113 = por %p111, %p112
      %p114 = scmp.ne.s32.totalorder %s100, %s101
      %p115 = scmp.eq.s32.totalorder %s27, 1
      %p116 = por %p114, %p115
      %p118 = scmp.ne.s32.totalorder %s101, %s117
      %p119 = scmp.eq.s32.totalorder %s27, 0
      %p120 = por %p118, %p119
      %s122 = sadd.s32 %s121, 1
      %p125 = scmp.eq.s32.totalorder %s21, 1
      %p126 = scmp.ne.s32.totalorder %s121, %s123
      %p127 = scmp.eq.s32.totalorder %s21, 0
      %p128 = por %p126, %p127
      %p129 = scmp.ne.s32.totalorder %s121, %s123
      %p130 = scmp.eq.s32.totalorder %s26, 1
      %p131 = por %p129, %p130
      %p132 = scmp.ne.s32.totalorder %s123, %s124
      %p133 = scmp.eq.s32.totalorder %s26, 0
      %p134 = por %p132, %p133
      %p135 = scmp.ne.s32.totalorder %s123, %s124
      %p136 = scmp.eq.s32.totalorder %s27, 1
      %p137 = por %p135, %p136
      %p139 = scmp.ne.s32.totalorder %s124, %s138
      %p140 = scmp.eq.s32.totalorder %s27, 0
      %p141 = por %p139, %p140
      %s143 = sadd.s32 %s142, 1
      %p146 = scmp.eq.s32.totalorder %s21, 1
      %p147 = scmp.ne.s32.totalorder %s142, %s144
      %p148 = scmp.eq.s32.totalorder %s21, 0
      %p149 = por %p147, %p148
      %p150 = scmp.ne.s32.totalorder %s142, %s144
      %p151 = scmp.eq.s32.totalorder %s26, 1
      %p152 = por %p150, %p151
      %p153 = scmp.ne.s32.totalorder %s144, %s145
      %p154 = scmp.eq.s32.totalorder %s26, 0
      %p155 = por %p153, %p154
      %p156 = scmp.ne.s32.totalorder %s144, %s145
      %p157 = scmp.eq.s32.totalorder %s27, 1
      %p158 = por %p156, %p157
      %p160 = scmp.ne.s32.totalorder %s145, %s159
      %p161 = scmp.eq.s32.totalorder %s27, 0
      %p162 = por %p160, %p161
      %s163 = ssub.s32 %s28, %s40
      %s164 = ssub.s32 %s29, %s36
      %s165 = sor.u32 %s163, %s164
      %p166 = scmp.eq.s32.totalorder %s165, 0
      %s168 = sadd.s32 %s167, 1
      %s169 = scalar_select %p166, %s167, %s168
      %p172 = pneg %p166
      %p173 = scmp.eq.s32.totalorder %s21, 1
      %p174 = por %p172, %p173
      %p175 = scmp.ne.s32.totalorder %s167, %s170
      %p176 = scmp.eq.s32.totalorder %s21, 0
      %p177 = por %p175, %p176
      %p178 = scmp.ne.s32.totalorder %s167, %s170
      %p179 = scmp.eq.s32.totalorder %s26, 1
      %p180 = por %p178, %p179
      %p181 = scmp.ne.s32.totalorder %s170, %s171
      %p182 = scmp.eq.s32.totalorder %s26, 0
      %p183 = por %p181, %p182
      %p184 = scmp.ne.s32.totalorder %s170, %s171
      %p185 = scmp.eq.s32.totalorder %s27, 1
      %p186 = por %p184, %p185
      %p188 = scmp.ne.s32.totalorder %s171, %s187
      %p189 = scmp.eq.s32.totalorder %s27, 0
      %p190 = por %p188, %p189
      %p191 = scmp.le.s32.totalorder 1, %s21
      %p192 = scmp.lt.s32.totalorder %s21, 3
      %p193 = pnand %p191, %p192
      %p194 = pneg %p193
      // Predicated region
      $region9: #{tpu_custom_call.1} parent=5 // pred_check
        _
      $region10: #{tpu_custom_call.1} parent=5 // pred_check_branch
        %196 = sbr.rel (%p193) target = $region12
      $region11: #{tpu_custom_call.1} parent=5 // pred_region
        %s197 = ssub.s32 %s21, 1
        // Predicated region
        $region13: #{tpu_custom_call.1} parent=11 // pred_check
          %p198 = pneg %p134
        $region14: #{tpu_custom_call.1} parent=11 // pred_check_branch
          %200 = sbr.rel (%p198) target = $region16
        $region15: #{tpu_custom_call.1} parent=11 // pred_region
          %s202 = ssub.s32 1024, 1024
          %203 = vsyncadd [#allocation10], %s202
          %s204 = sshll.u32 [#allocation9], 4
          %s205 = int_to_ptr.vmem [resolvable:$true] %s204
          %210 = dma.hbm_to_vmem [thread:$0]  %s3, 1024, %s205, [#allocation10], 64, 64, 4
        $region16: #{tpu_custom_call.1} parent=11 // pred_fallthru
          _
        // Predicated region
        $region17: #{tpu_custom_call.1} parent=11 // pred_check
          %p211 = pneg %p155
        $region18: #{tpu_custom_call.1} parent=11 // pred_check_branch
          %213 = sbr.rel (%p211) target = $region20
        $region19: #{tpu_custom_call.1} parent=11 // pred_region
          _
        $region20: #{tpu_custom_call.1} parent=11 // pred_fallthru
          _
      $region12: #{tpu_custom_call.1} parent=5 // pred_fallthru
        _
      %p214 = scmp.lt.s32.totalorder %s21, 2
      // Predicated region
      $region21: #{tpu_custom_call.1} parent=5 // pred_check
        %p215 = pneg %p214
      $region22: #{tpu_custom_call.1} parent=5 // pred_check_branch
        %217 = sbr.rel (%p215) target = $region24
      $region23: #{tpu_custom_call.1} parent=5 // pred_region
        // Predicated region
        $region25: #{tpu_custom_call.1} parent=23 // pred_check
          %p218 = pneg %p55
        $region26: #{tpu_custom_call.1} parent=23 // pred_check_branch
          %220 = sbr.rel (%p218) target = $region28
        $region27: #{tpu_custom_call.1} parent=23 // pred_region
          %s221 = sand.u32 %s45, 1
          %s222 = scalar_lea.sflag [#allocation4], %s221
          %s223 = sand.u32 %s45, 1
          %s224 = smul.addr %s223, 8
          %s225 = scalar_lea.vmem [#allocation3], %s224
          %s227 = ssub.s32 128, 128
          %228 = vsyncadd %s222, %s227
          %s229 = sadd.s32 %s29, %s28
          %s230 = smul.addr %s229, 128
          %s231 = scalar_lea.hbm %s0, %s230
          %s233 = sshll.u32 %s225, 4
          %s234 = int_to_ptr.vmem [resolvable:$true] %s233
          %236 = dma.hbm_to_vmem [thread:$0]  %s231, 128, %s234, %s222
        $region28: #{tpu_custom_call.1} parent=23 // pred_fallthru
          _
        // Predicated region
        $region29: #{tpu_custom_call.1} parent=23 // pred_check
          %p237 = pneg %p81
        $region30: #{tpu_custom_call.1} parent=23 // pred_check_branch
          %239 = sbr.rel (%p237) target = $region32
        $region31: #{tpu_custom_call.1} parent=23 // pred_region
          %s240 = sand.u32 %s21, 1
          %s241 = scalar_lea.sflag [#allocation7], %s240
          %s242 = sand.u32 %s71, 1
          %s243 = smul.addr %s242, 8
          %s244 = scalar_lea.vmem [#allocation6], %s243
          %s246 = ssub.s32 128, 128
          %247 = vsyncadd %s241, %s246
          %s248 = smul.addr %s28, 128
          %s249 = scalar_lea.hbm %s1, %s248
          %s251 = sshll.u32 %s244, 4
          %s252 = int_to_ptr.vmem [resolvable:$true] %s251
          %254 = dma.hbm_to_vmem [thread:$0]  %s249, 128, %s252, %s241
        $region32: #{tpu_custom_call.1} parent=23 // pred_fallthru
          _
        // Predicated region
        $region33: #{tpu_custom_call.1} parent=23 // pred_check
          %p255 = pneg %p107
        $region34: #{tpu_custom_call.1} parent=23 // pred_check_branch
          %257 = sbr.rel (%p255) target = $region36
        $region35: #{tpu_custom_call.1} parent=23 // pred_region
          %s258 = sand.u32 %s21, 1
          %s259 = scalar_lea.sflag [#allocation7], %s258
          %s260 = sand.u32 %s97, 1
          %s261 = smul.addr %s260, 8
          %s262 = scalar_lea.vmem [#allocation8], %s261
          %s264 = ssub.s32 128, 128
          %265 = vsyncadd %s259, %s264
          %s266 = smul.addr %s28, 128
          %s267 = scalar_lea.hbm %s2, %s266
          %s269 = sshll.u32 %s262, 4
          %s270 = int_to_ptr.vmem [resolvable:$true] %s269
          %272 = dma.hbm_to_vmem [thread:$0]  %s267, 128, %s270, %s259
        $region36: #{tpu_custom_call.1} parent=23 // pred_fallthru
          _
      $region24: #{tpu_custom_call.1} parent=5 // pred_fallthru
        _
      %p273 = scmp.le.s32.totalorder 1, %s21
      %p274 = scmp.lt.s32.totalorder %s21, 3
      %p275 = pnand %p273, %p274
      %p276 = pneg %p275
      // Predicated region
      $region37: #{tpu_custom_call.1} parent=5 // pred_check
        _
      $region38: #{tpu_custom_call.1} parent=5 // pred_check_branch
        %278 = sbr.rel (%p275) target = $region40
      $region39: #{tpu_custom_call.1} parent=5 // pred_region
        %s279 = ssub.s32 %s21, 1
        %s280 = sand.u32 %s48, 1
        %s281 = scalar_lea.sflag [#allocation4], %s280
        %s282 = sand.u32 %s48, 1
        %s283 = smul.addr %s282, 8
        %s284 = scalar_lea.vmem [#allocation3], %s283
        // Predicated region
        $region41: #{tpu_custom_call.1} parent=39 // pred_check
          %p285 = pneg %p61
        $region42: #{tpu_custom_call.1} parent=39 // pred_check_branch
          %287 = sbr.rel (%p285) target = $region44
        $region43: #{tpu_custom_call.1} parent=39 // pred_region
          %288 = dma.done %s281, 128
        $region44: #{tpu_custom_call.1} parent=39 // pred_fallthru
          _
        %s289 = sand.u32 %s26, 1
        %s290 = scalar_lea.sflag [#allocation7], %s289
        %s291 = sand.u32 %s74, 1
        %s292 = smul.addr %s291, 8
        %s293 = scalar_lea.vmem [#allocation6], %s292
        // Predicated region
        $region45: #{tpu_custom_call.1} parent=39 // pred_check
          %p294 = pneg %p87
        $region46: #{tpu_custom_call.1} parent=39 // pred_check_branch
          %296 = sbr.rel (%p294) target = $region48
        $region47: #{tpu_custom_call.1} parent=39 // pred_region
          %297 = dma.done %s290, 128
        $region48: #{tpu_custom_call.1} parent=39 // pred_fallthru
          _
        %s298 = sand.u32 %s26, 1
        %s299 = scalar_lea.sflag [#allocation7], %s298
        %s300 = sand.u32 %s100, 1
        %s301 = smul.addr %s300, 8
        %s302 = scalar_lea.vmem [#allocation8], %s301
        // Predicated region
        $region49: #{tpu_custom_call.1} parent=39 // pred_check
          %p303 = pneg %p113
        $region50: #{tpu_custom_call.1} parent=39 // pred_check_branch
          %305 = sbr.rel (%p303) target = $region52
        $region51: #{tpu_custom_call.1} parent=39 // pred_region
          %306 = dma.done %s299, 128
        $region52: #{tpu_custom_call.1} parent=39 // pred_fallthru
          _
        // Predicated region
        $region53: #{tpu_custom_call.1} parent=39 // pred_check
          %p307 = pneg %p134
        $region54: #{tpu_custom_call.1} parent=39 // pred_check_branch
          %309 = sbr.rel (%p307) target = $region56
        $region55: #{tpu_custom_call.1} parent=39 // pred_region
          %310 = dma.done [#allocation10], 1024
        $region56: #{tpu_custom_call.1} parent=39 // pred_fallthru
          _
        %s311 = sand.u32 %s48, 1
        %s312 = scalar_lea.sflag [#allocation4], %s311
        %s313 = sand.u32 %s48, 1
        %s314 = smul.addr %s313, 8
        %s315 = scalar_lea.vmem [#allocation3], %s314
        %p316 = pneg %p61
        %p317 = pneg %p58
        %s318 = sand.u32 %s26, 1
        %s319 = scalar_lea.sflag [#allocation7], %s318
        %s320 = sand.u32 %s74, 1
        %s321 = smul.addr %s320, 8
        %s322 = scalar_lea.vmem [#allocation6], %s321
        %p323 = pneg %p87
        %p324 = pneg %p84
        %s325 = sand.u32 %s26, 1
        %s326 = scalar_lea.sflag [#allocation7], %s325
        %s327 = sand.u32 %s100, 1
        %s328 = smul.addr %s327, 8
        %s329 = scalar_lea.vmem [#allocation8], %s328
        %p330 = pneg %p113
        %p331 = pneg %p110
        %p332 = pneg %p134
        %p333 = pneg %p131
        %p334 = pneg %p155
        %p335 = pneg %p152
        %p336 = pneg %p183
        %p337 = pneg %p180
        %s338 = sand.u32 %s170, 1
        %s339 = scalar_lea.sflag [#allocation5], %s338
        %s340 = sand.u32 %s170, 1
        %s341 = smul.addr %s340, 8
        %s342 = scalar_lea.vmem [#allocation11], %s341
        %v344 = vld [vmem:[%s284] sm:$0xff]
        %v345 = vpack.c.bf16 %v344, %v344
        %v346 = vld [vmem:[%s293] sm:$0xff]
        %v347 = vpack.c.bf16 %v346, %v346
        %v348 = vld [vmem:[%s302] sm:$0xff]
        %v349 = vpack.c.bf16 %v348, %v348
        %v350 = vld [vmem:[#allocation9] sm:$0xf]
        %v351 = vld [vmem:[#allocation9 + $0x4] sm:$0xf]
        %v352 = vld [vmem:[#allocation9 + $0x8] sm:$0xf]
        %v353 = vld [vmem:[#allocation9 + $0xc] sm:$0xf]
        %v354 = vld [vmem:[%s4] sm:$0x1]
        %v355 = vlaneseq
        %v356 = vshrl.u32 %v355, 7
        %v357 = vsub.s32 0, %v356
        %v358 = vrot.slane %v354, %v357
        %v363 = vunpack.c.l.b16 %v350
        %v364 = vunpack.c.l.b16 %v351
        %v365 = vunpack.c.l.b16 %v352
        %v366 = vunpack.c.l.b16 %v353
        %v367 = vpack.c.b16 %v364, %v363
        %v368 = vpack.c.b16 %v366, %v365
        %vm371 = vcmask 261120
        %v373 = vsel %vm371, %v345, 0
        %375 = vmatprep.subr.bf16.mxu0 0
        %376 = vmatpush1.bf16.msra.mxu0 0
        %377 = vmatprep.subr.bf16.mxu0 0
        %378 = vmatpush1.bf16.msra.mxu0 0
        %379 = vmatprep.subr.bf16.mxu0 0
        %380 = vmatpush1.bf16.msra.mxu0 0
        %381 = vmatprep.subr.bf16.mxu0 0
        %382 = vmatpush1.bf16.msra.mxu0 0
        %383 = vmatprep.subr.bf16.mxu0 0
        %384 = vmatpush1.bf16.msra.mxu0 0
        %385 = vmatprep.subr.bf16.mxu0 0
        %386 = vmatpush1.bf16.msra.mxu0 0
        %387 = vmatprep.subr.bf16.mxu0 0
        %388 = vmatpush1.bf16.msra.mxu0 %v368
        %389 = vmatprep.subr.bf16.mxu0 0
        %390 = vmatpush1.bf16.msra.mxu0 %v367
        %391 = vmatprep.subr.bf16.mxu0 0
        %392 = vmatpush2.bf16.msra.mxu0 0
        %393 = vmatprep.subr.bf16.mxu0 0
        %394 = vmatpush2.bf16.msra.mxu0 0
        %395 = vmatprep.subr.bf16.mxu0 0
        %396 = vmatpush2.bf16.msra.mxu0 0
        %397 = vmatprep.subr.bf16.mxu0 0
        %398 = vmatpush2.bf16.msra.mxu0 0
        %399 = vmatprep.subr.bf16.mxu0 0
        %400 = vmatpush2.bf16.msra.mxu0 0
        %401 = vmatprep.subr.bf16.mxu0 0
        %402 = vmatpush2.bf16.msra.mxu0 0
        %403 = vmatprep.subr.bf16.mxu0 0
        %404 = vmatpush2.bf16.msra.mxu0 0
        %405 = vmatprep.subr.bf16.mxu0 0
        %406 = vmatpush2.bf16.msra.mxu0 0
        %407 = vmatprep.mubr.bf16.mxu0 0
        %408 = vmatmul.mubr.bf16.gmra.mxu0 %v373
        %v409 = vpop.f32.mrf.mxu0
        %v410 = vadd.f32 %v358, %v409
        %v411 = vpop.f32.mrf.mxu0
        %v412 = vpop.f32.mrf.mxu0
        %v413 = vpop.f32.mrf.mxu0
        %414 = vdwg.mxu0
        %v415 = vpack.c.bf16 %v410, %v410
        %s416 = scalar_lea.vmem [#allocation9], 16
        %v417 = vld [vmem:[%s416] sm:$0xf]
        %v418 = vld [vmem:[%s416 + $0x4] sm:$0xf]
        %v419 = vld [vmem:[%s416 + $0x8] sm:$0xf]
        %v420 = vld [vmem:[%s416 + $0xc] sm:$0xf]
        %v421 = vld [vmem:[%s4 + $0x1] sm:$0x1]
        %v422 = vlaneseq
        %v423 = vshrl.u32 %v422, 7
        %v424 = vsub.s32 0, %v423
        %v425 = vrot.slane %v421, %v424
        %v430 = vunpack.c.l.b16 %v417
        %v431 = vunpack.c.l.b16 %v418
        %v432 = vunpack.c.l.b16 %v419
        %v433 = vunpack.c.l.b16 %v420
        %v434 = vpack.c.b16 %v431, %v430
        %v435 = vpack.c.b16 %v433, %v432
        %v439 = vsel %vm371, %v347, 0
        %441 = vmatprep.subr.bf16.mxu0 0
        %442 = vmatpush1.bf16.msra.mxu0 0
        %443 = vmatprep.subr.bf16.mxu0 0
        %444 = vmatpush1.bf16.msra.mxu0 0
        %445 = vmatprep.subr.bf16.mxu0 0
        %446 = vmatpush1.bf16.msra.mxu0 0
        %447 = vmatprep.subr.bf16.mxu0 0
        %448 = vmatpush1.bf16.msra.mxu0 0
        %449 = vmatprep.subr.bf16.mxu0 0
        %450 = vmatpush1.bf16.msra.mxu0 0
        %451 = vmatprep.subr.bf16.mxu0 0
        %452 = vmatpush1.bf16.msra.mxu0 0
        %453 = vmatprep.subr.bf16.mxu0 0
        %454 = vmatpush1.bf16.msra.mxu0 %v435
        %455 = vmatprep.subr.bf16.mxu0 0
        %456 = vmatpush1.bf16.msra.mxu0 %v434
        %457 = vmatprep.subr.bf16.mxu0 0
        %458 = vmatpush2.bf16.msra.mxu0 0
        %459 = vmatprep.subr.bf16.mxu0 0
        %460 = vmatpush2.bf16.msra.mxu0 0
        %461 = vmatprep.subr.bf16.mxu0 0
        %462 = vmatpush2.bf16.msra.mxu0 0
        %463 = vmatprep.subr.bf16.mxu0 0
        %464 = vmatpush2.bf16.msra.mxu0 0
        %465 = vmatprep.subr.bf16.mxu0 0
        %466 = vmatpush2.bf16.msra.mxu0 0
        %467 = vmatprep.subr.bf16.mxu0 0
        %468 = vmatpush2.bf16.msra.mxu0 0
        %469 = vmatprep.subr.bf16.mxu0 0
        %470 = vmatpush2.bf16.msra.mxu0 0
        %471 = vmatprep.subr.bf16.mxu0 0
        %472 = vmatpush2.bf16.msra.mxu0 0
        %473 = vmatprep.mubr.bf16.mxu0 0
        %474 = vmatmul.mubr.bf16.gmra.mxu0 %v439
        %v475 = vpop.f32.mrf.mxu0
        %v476 = vadd.f32 %v425, %v475
        %v477 = vpop.f32.mrf.mxu0
        %v478 = vpop.f32.mrf.mxu0
        %v479 = vpop.f32.mrf.mxu0
        %480 = vdwg.mxu0
        %v481 = vpack.c.bf16 %v476, %v476
        %s482 = scalar_lea.vmem [#allocation9], 32
        %v483 = vld [vmem:[%s482] sm:$0xf]
        %v484 = vld [vmem:[%s482 + $0x4] sm:$0xf]
        %v485 = vld [vmem:[%s482 + $0x8] sm:$0xf]
        %v486 = vld [vmem:[%s482 + $0xc] sm:$0xf]
        %v487 = vld [vmem:[%s4 + $0x2] sm:$0x1]
        %v488 = vlaneseq
        %v489 = vshrl.u32 %v488, 7
        %v490 = vsub.s32 0, %v489
        %v491 = vrot.slane %v487, %v490
        %v496 = vunpack.c.l.b16 %v483
        %v497 = vunpack.c.l.b16 %v484
        %v498 = vunpack.c.l.b16 %v485
        %v499 = vunpack.c.l.b16 %v486
        %v500 = vpack.c.b16 %v497, %v496
        %v501 = vpack.c.b16 %v499, %v498
        %v505 = vsel %vm371, %v349, 0
        %507 = vmatprep.subr.bf16.mxu0 0
        %508 = vmatpush1.bf16.msra.mxu0 0
        %509 = vmatprep.subr.bf16.mxu0 0
        %510 = vmatpush1.bf16.msra.mxu0 0
        %511 = vmatprep.subr.bf16.mxu0 0
        %512 = vmatpush1.bf16.msra.mxu0 0
        %513 = vmatprep.subr.bf16.mxu0 0
        %514 = vmatpush1.bf16.msra.mxu0 0
        %515 = vmatprep.subr.bf16.mxu0 0
        %516 = vmatpush1.bf16.msra.mxu0 0
        %517 = vmatprep.subr.bf16.mxu0 0
        %518 = vmatpush1.bf16.msra.mxu0 0
        %519 = vmatprep.subr.bf16.mxu0 0
        %520 = vmatpush1.bf16.msra.mxu0 %v501
        %521 = vmatprep.subr.bf16.mxu0 0
        %522 = vmatpush1.bf16.msra.mxu0 %v500
        %523 = vmatprep.subr.bf16.mxu0 0
        %524 = vmatpush2.bf16.msra.mxu0 0
        %525 = vmatprep.subr.bf16.mxu0 0
        %526 = vmatpush2.bf16.msra.mxu0 0
        %527 = vmatprep.subr.bf16.mxu0 0
        %528 = vmatpush2.bf16.msra.mxu0 0
        %529 = vmatprep.subr.bf16.mxu0 0
        %530 = vmatpush2.bf16.msra.mxu0 0
        %531 = vmatprep.subr.bf16.mxu0 0
        %532 = vmatpush2.bf16.msra.mxu0 0
        %533 = vmatprep.subr.bf16.mxu0 0
        %534 = vmatpush2.bf16.msra.mxu0 0
        %535 = vmatprep.subr.bf16.mxu0 0
        %536 = vmatpush2.bf16.msra.mxu0 0
        %537 = vmatprep.subr.bf16.mxu0 0
        %538 = vmatpush2.bf16.msra.mxu0 0
        %539 = vmatprep.mubr.bf16.mxu0 0
        %540 = vmatmul.mubr.bf16.gmra.mxu0 %v505
        %v541 = vpop.f32.mrf.mxu0
        %v542 = vadd.f32 %v491, %v541
        %v543 = vpop.f32.mrf.mxu0
        %v544 = vpop.f32.mrf.mxu0
        %v545 = vpop.f32.mrf.mxu0
        %546 = vdwg.mxu0
        %v547 = vpack.c.bf16 %v542, %v542
        %vm548 = vcmask 64512
        %v550 = vsel %vm548, %v415, 0
        %v553 = vsel %vm548, %v481, 0
        %555 = vmatprep.subr.bf16.mxu0 0
        %556 = vmatpush1.bf16.xpose.msra.mxu0 0
        %557 = vmatprep.subr.bf16.mxu0 0
        %558 = vmatpush1.bf16.xpose.msra.mxu0 0
        %559 = vmatprep.subr.bf16.mxu0 0
        %560 = vmatpush1.bf16.xpose.msra.mxu0 0
        %561 = vmatprep.subr.bf16.mxu0 0
        %562 = vmatpush1.bf16.xpose.msra.mxu0 0
        %563 = vmatprep.subr.bf16.mxu0 0
        %564 = vmatpush1.bf16.xpose.msra.mxu0 0
        %565 = vmatprep.subr.bf16.mxu0 0
        %566 = vmatpush1.bf16.xpose.msra.mxu0 0
        %567 = vmatprep.subr.bf16.mxu0 0
        %568 = vmatpush1.bf16.xpose.msra.mxu0 0
        %569 = vmatprep.subr.bf16.mxu0 0
        %570 = vmatpush1.bf16.xpose.msra.mxu0 %v553
        %571 = vmatprep.subr.bf16.mxu0 0
        %572 = vmatpush2.bf16.xpose.msra.mxu0 0
        %573 = vmatprep.subr.bf16.mxu0 0
        %574 = vmatpush2.bf16.xpose.msra.mxu0 0
        %575 = vmatprep.subr.bf16.mxu0 0
        %576 = vmatpush2.bf16.xpose.msra.mxu0 0
        %577 = vmatprep.subr.bf16.mxu0 0
        %578 = vmatpush2.bf16.xpose.msra.mxu0 0
        %579 = vmatprep.subr.bf16.mxu0 0
        %580 = vmatpush2.bf16.xpose.msra.mxu0 0
        %581 = vmatprep.subr.bf16.mxu0 0
        %582 = vmatpush2.bf16.xpose.msra.mxu0 0
        %583 = vmatprep.subr.bf16.mxu0 0
        %584 = vmatpush2.bf16.xpose.msra.mxu0 0
        %585 = vmatprep.subr.bf16.mxu0 0
        %586 = vmatpush2.bf16.xpose.msra.mxu0 0
        %587 = vmatprep.mubr.bf16.mxu0 0
        %588 = vmatmul.mubr.bf16.gmra.mxu0 %v550
        %v589 = vpop.f32.mrf.mxu0
        %v590 = vadd.f32 0.0, %v589
        %v591 = vpop.f32.mrf.mxu0
        %v592 = vpop.f32.mrf.mxu0
        %v593 = vpop.f32.mrf.mxu0
        %594 = vdwg.mxu0
        %v595 = vsel %vm548, %v590, -inf
        %596 = vmax.xlane.f32.xlu0 %v595
        %v597 = vpop.xlane.xlu0 %596
        %v598 = vsub.f32 %v590, %v597
        %v599 = vmul.f32 %v598, 1.442695
        %v600 = vpow.pop %v599
        %v601 = vsel %vm548, %v600, 0.0
        %602 = vadd.xlane.f32.xlu0 %v601
        %v603 = vpop.xlane.xlu0 %602
        %v604 = vrcp.pop %v603
        %v605 = vmul.f32 %v600, %v604
        %v606 = vpack.c.bf16 %v605, %v605
        %v608 = vsel %vm548, %v606, 0
        %vm610 = vcmask 1043456
        %v612 = vsel %vm610, %v547, 0
        %614 = vmatprep.subr.bf16.mxu0 0
        %615 = vmatpush1.bf16.msra.mxu0 0
        %616 = vmatprep.subr.bf16.mxu0 0
        %617 = vmatpush1.bf16.msra.mxu0 0
        %618 = vmatprep.subr.bf16.mxu0 0
        %619 = vmatpush1.bf16.msra.mxu0 0
        %620 = vmatprep.subr.bf16.mxu0 0
        %621 = vmatpush1.bf16.msra.mxu0 0
        %622 = vmatprep.subr.bf16.mxu0 0
        %623 = vmatpush1.bf16.msra.mxu0 0
        %624 = vmatprep.subr.bf16.mxu0 0
        %625 = vmatpush1.bf16.msra.mxu0 0
        %626 = vmatprep.subr.bf16.mxu0 0
        %627 = vmatpush1.bf16.msra.mxu0 0
        %628 = vmatprep.subr.bf16.mxu0 0
        %629 = vmatpush1.bf16.msra.mxu0 %v612
        %630 = vmatprep.subr.bf16.mxu0 0
        %631 = vmatpush2.bf16.msra.mxu0 0
        %632 = vmatprep.subr.bf16.mxu0 0
        %633 = vmatpush2.bf16.msra.mxu0 0
        %634 = vmatprep.subr.bf16.mxu0 0
        %635 = vmatpush2.bf16.msra.mxu0 0
        %636 = vmatprep.subr.bf16.mxu0 0
        %637 = vmatpush2.bf16.msra.mxu0 0
        %638 = vmatprep.subr.bf16.mxu0 0
        %639 = vmatpush2.bf16.msra.mxu0 0
        %640 = vmatprep.subr.bf16.mxu0 0
        %641 = vmatpush2.bf16.msra.mxu0 0
        %642 = vmatprep.subr.bf16.mxu0 0
        %643 = vmatpush2.bf16.msra.mxu0 0
        %644 = vmatprep.subr.bf16.mxu0 0
        %645 = vmatpush2.bf16.msra.mxu0 0
        %646 = vmatprep.mubr.bf16.mxu0 0
        %647 = vmatmul.mubr.bf16.gmra.mxu0 %v608
        %v648 = vpop.f32.mrf.mxu0
        %v649 = vadd.f32 0.0, %v648
        %v650 = vpop.f32.mrf.mxu0
        %v651 = vpop.f32.mrf.mxu0
        %v652 = vpop.f32.mrf.mxu0
        %653 = vdwg.mxu0
        %v654 = vpack.c.bf16 %v649, %v649
        %vm655 = vcmask 60416
        %656 = vst.msk [vmem:[#allocation2] sm:$0xf] %vm655, %v654
        %658 = vrot.lane.b32.xlu0 %v415, 120
        %v659 = vpop.permute.xlu0 %658
        %661 = vrot.lane.b32.xlu0 %v481, 120
        %v662 = vpop.permute.xlu0 %661
        %v664 = vsel %vm548, %v659, 0
        %v667 = vsel %vm548, %v662, 0
        %669 = vmatprep.subr.bf16.mxu0 0
        %670 = vmatpush1.bf16.xpose.msra.mxu0 0
        %671 = vmatprep.subr.bf16.mxu0 0
        %672 = vmatpush1.bf16.xpose.msra.mxu0 0
        %673 = vmatprep.subr.bf16.mxu0 0
        %674 = vmatpush1.bf16.xpose.msra.mxu0 0
        %675 = vmatprep.subr.bf16.mxu0 0
        %676 = vmatpush1.bf16.xpose.msra.mxu0 0
        %677 = vmatprep.subr.bf16.mxu0 0
        %678 = vmatpush1.bf16.xpose.msra.mxu0 0
        %679 = vmatprep.subr.bf16.mxu0 0
        %680 = vmatpush1.bf16.xpose.msra.mxu0 0
        %681 = vmatprep.subr.bf16.mxu0 0
        %682 = vmatpush1.bf16.xpose.msra.mxu0 0
        %683 = vmatprep.subr.bf16.mxu0 0
        %684 = vmatpush1.bf16.xpose.msra.mxu0 %v667
        %685 = vmatprep.subr.bf16.mxu0 0
        %686 = vmatpush2.bf16.xpose.msra.mxu0 0
        %687 = vmatprep.subr.bf16.mxu0 0
        %688 = vmatpush2.bf16.xpose.msra.mxu0 0
        %689 = vmatprep.subr.bf16.mxu0 0
        %690 = vmatpush2.bf16.xpose.msra.mxu0 0
        %691 = vmatprep.subr.bf16.mxu0 0
        %692 = vmatpush2.bf16.xpose.msra.mxu0 0
        %693 = vmatprep.subr.bf16.mxu0 0
        %694 = vmatpush2.bf16.xpose.msra.mxu0 0
        %695 = vmatprep.subr.bf16.mxu0 0
        %696 = vmatpush2.bf16.xpose.msra.mxu0 0
        %697 = vmatprep.subr.bf16.mxu0 0
        %698 = vmatpush2.bf16.xpose.msra.mxu0 0
        %699 = vmatprep.subr.bf16.mxu0 0
        %700 = vmatpush2.bf16.xpose.msra.mxu0 0
        %701 = vmatprep.mubr.bf16.mxu0 0
        %702 = vmatmul.mubr.bf16.gmra.mxu0 %v664
        %v703 = vpop.f32.mrf.mxu0
        %v704 = vadd.f32 0.0, %v703
        %v705 = vpop.f32.mrf.mxu0
        %v706 = vpop.f32.mrf.mxu0
        %v707 = vpop.f32.mrf.mxu0
        %708 = vdwg.mxu0
        %v709 = vsel %vm548, %v704, -inf
        %710 = vmax.xlane.f32.xlu0 %v709
        %v711 = vpop.xlane.xlu0 %710
        %v712 = vsub.f32 %v704, %v711
        %v713 = vmul.f32 %v712, 1.442695
        %v714 = vpow.pop %v713
        %v715 = vsel %vm548, %v714, 0.0
        %716 = vadd.xlane.f32.xlu0 %v715
        %v717 = vpop.xlane.xlu0 %716
        %v718 = vrcp.pop %v717
        %v719 = vmul.f32 %v714, %v718
        %v720 = vpack.c.bf16 %v719, %v719
        %722 = vrot.lane.b32.xlu0 %v547, 120
        %v723 = vpop.permute.xlu0 %722
        %v725 = vsel %vm548, %v720, 0
        %v728 = vsel %vm610, %v723, 0
        %730 = vmatprep.subr.bf16.mxu0 0
        %731 = vmatpush1.bf16.msra.mxu0 0
        %732 = vmatprep.subr.bf16.mxu0 0
        %733 = vmatpush1.bf16.msra.mxu0 0
        %734 = vmatprep.subr.bf16.mxu0 0
        %735 = vmatpush1.bf16.msra.mxu0 0
        %736 = vmatprep.subr.bf16.mxu0 0
        %737 = vmatpush1.bf16.msra.mxu0 0
        %738 = vmatprep.subr.bf16.mxu0 0
        %739 = vmatpush1.bf16.msra.mxu0 0
        %740 = vmatprep.subr.bf16.mxu0 0
        %741 = vmatpush1.bf16.msra.mxu0 0
        %742 = vmatprep.subr.bf16.mxu0 0
        %743 = vmatpush1.bf16.msra.mxu0 0
        %744 = vmatprep.subr.bf16.mxu0 0
        %745 = vmatpush1.bf16.msra.mxu0 %v728
        %746 = vmatprep.subr.bf16.mxu0 0
        %747 = vmatpush2.bf16.msra.mxu0 0
        %748 = vmatprep.subr.bf16.mxu0 0
        %749 = vmatpush2.bf16.msra.mxu0 0
        %750 = vmatprep.subr.bf16.mxu0 0
        %751 = vmatpush2.bf16.msra.mxu0 0
        %752 = vmatprep.subr.bf16.mxu0 0
        %753 = vmatpush2.bf16.msra.mxu0 0
        %754 = vmatprep.subr.bf16.mxu0 0
        %755 = vmatpush2.bf16.msra.mxu0 0
        %756 = vmatprep.subr.bf16.mxu0 0
        %757 = vmatpush2.bf16.msra.mxu0 0
        %758 = vmatprep.subr.bf16.mxu0 0
        %759 = vmatpush2.bf16.msra.mxu0 0
        %760 = vmatprep.subr.bf16.mxu0 0
        %761 = vmatpush2.bf16.msra.mxu0 0
        %762 = vmatprep.mubr.bf16.mxu0 0
        %763 = vmatmul.mubr.bf16.gmra.mxu0 %v725
        %v764 = vpop.f32.mrf.mxu0
        %v765 = vadd.f32 0.0, %v764
        %v766 = vpop.f32.mrf.mxu0
        %v767 = vpop.f32.mrf.mxu0
        %v768 = vpop.f32.mrf.mxu0
        %769 = vdwg.mxu0
        %v770 = vpack.c.bf16 %v765, %v765
        %v772 = vunpack.c.l.b16 %v770
        %v773 = vpack.c.b16 %v772, %v772
        %774 = vrot.lane.b32.xlu0 %v773, 8
        %v775 = vpop.permute.xlu0 %774
        %vm777 = vcmask 126016
        %778 = vst.msk [vmem:[#allocation2] sm:$0xf] %vm777, %v775
        %779 = vrot.lane.b32.xlu0 %v415, 112
        %v780 = vpop.permute.xlu0 %779
        %781 = vrot.lane.b32.xlu0 %v481, 112
        %v782 = vpop.permute.xlu0 %781
        %v784 = vsel %vm548, %v780, 0
        %v787 = vsel %vm548, %v782, 0
        %789 = vmatprep.subr.bf16.mxu0 0
        %790 = vmatpush1.bf16.xpose.msra.mxu0 0
        %791 = vmatprep.subr.bf16.mxu0 0
        %792 = vmatpush1.bf16.xpose.msra.mxu0 0
        %793 = vmatprep.subr.bf16.mxu0 0
        %794 = vmatpush1.bf16.xpose.msra.mxu0 0
        %795 = vmatprep.subr.bf16.mxu0 0
        %796 = vmatpush1.bf16.xpose.msra.mxu0 0
        %797 = vmatprep.subr.bf16.mxu0 0
        %798 = vmatpush1.bf16.xpose.msra.mxu0 0
        %799 = vmatprep.subr.bf16.mxu0 0
        %800 = vmatpush1.bf16.xpose.msra.mxu0 0
        %801 = vmatprep.subr.bf16.mxu0 0
        %802 = vmatpush1.bf16.xpose.msra.mxu0 0
        %803 = vmatprep.subr.bf16.mxu0 0
        %804 = vmatpush1.bf16.xpose.msra.mxu0 %v787
        %805 = vmatprep.subr.bf16.mxu0 0
        %806 = vmatpush2.bf16.xpose.msra.mxu0 0
        %807 = vmatprep.subr.bf16.mxu0 0
        %808 = vmatpush2.bf16.xpose.msra.mxu0 0
        %809 = vmatprep.subr.bf16.mxu0 0
        %810 = vmatpush2.bf16.xpose.msra.mxu0 0
        %811 = vmatprep.subr.bf16.mxu0 0
        %812 = vmatpush2.bf16.xpose.msra.mxu0 0
        %813 = vmatprep.subr.bf16.mxu0 0
        %814 = vmatpush2.bf16.xpose.msra.mxu0 0
        %815 = vmatprep.subr.bf16.mxu0 0
        %816 = vmatpush2.bf16.xpose.msra.mxu0 0
        %817 = vmatprep.subr.bf16.mxu0 0
        %818 = vmatpush2.bf16.xpose.msra.mxu0 0
        %819 = vmatprep.subr.bf16.mxu0 0
        %820 = vmatpush2.bf16.xpose.msra.mxu0 0
        %821 = vmatprep.mubr.bf16.mxu0 0
        %822 = vmatmul.mubr.bf16.gmra.mxu0 %v784
        %v823 = vpop.f32.mrf.mxu0
        %v824 = vadd.f32 0.0, %v823
        %v825 = vpop.f32.mrf.mxu0
        %v826 = vpop.f32.mrf.mxu0
        %v827 = vpop.f32.mrf.mxu0
        %828 = vdwg.mxu0
        %v829 = vsel %vm548, %v824, -inf
        %830 = vmax.xlane.f32.xlu0 %v829
        %v831 = vpop.xlane.xlu0 %830
        %v832 = vsub.f32 %v824, %v831
        %v833 = vmul.f32 %v832, 1.442695
        %v834 = vpow.pop %v833
        %v835 = vsel %vm548, %v834, 0.0
        %836 = vadd.xlane.f32.xlu0 %v835
        %v837 = vpop.xlane.xlu0 %836
        %v838 = vrcp.pop %v837
        %v839 = vmul.f32 %v834, %v838
        %v840 = vpack.c.bf16 %v839, %v839
        %841 = vrot.lane.b32.xlu0 %v547, 112
        %v842 = vpop.permute.xlu0 %841
        %v844 = vsel %vm548, %v840, 0
        %v847 = vsel %vm610, %v842, 0
        %849 = vmatprep.subr.bf16.mxu0 0
        %850 = vmatpush1.bf16.msra.mxu0 0
        %851 = vmatprep.subr.bf16.mxu0 0
        %852 = vmatpush1.bf16.msra.mxu0 0
        %853 = vmatprep.subr.bf16.mxu0 0
        %854 = vmatpush1.bf16.msra.mxu0 0
        %855 = vmatprep.subr.bf16.mxu0 0
        %856 = vmatpush1.bf16.msra.mxu0 0
        %857 = vmatprep.subr.bf16.mxu0 0
        %858 = vmatpush1.bf16.msra.mxu0 0
        %859 = vmatprep.subr.bf16.mxu0 0
        %860 = vmatpush1.bf16.msra.mxu0 0
        %861 = vmatprep.subr.bf16.mxu0 0
        %862 = vmatpush1.bf16.msra.mxu0 0
        %863 = vmatprep.subr.bf16.mxu0 0
        %864 = vmatpush1.bf16.msra.mxu0 %v847
        %865 = vmatprep.subr.bf16.mxu0 0
        %866 = vmatpush2.bf16.msra.mxu0 0
        %867 = vmatprep.subr.bf16.mxu0 0
        %868 = vmatpush2.bf16.msra.mxu0 0
        %869 = vmatprep.subr.bf16.mxu0 0
        %870 = vmatpush2.bf16.msra.mxu0 0
        %871 = vmatprep.subr.bf16.mxu0 0
        %872 = vmatpush2.bf16.msra.mxu0 0
        %873 = vmatprep.subr.bf16.mxu0 0
        %874 = vmatpush2.bf16.msra.mxu0 0
        %875 = vmatprep.subr.bf16.mxu0 0
        %876 = vmatpush2.bf16.msra.mxu0 0
        %877 = vmatprep.subr.bf16.mxu0 0
        %878 = vmatpush2.bf16.msra.mxu0 0
        %879 = vmatprep.subr.bf16.mxu0 0
        %880 = vmatpush2.bf16.msra.mxu0 0
        %881 = vmatprep.mubr.bf16.mxu0 0
        %882 = vmatmul.mubr.bf16.gmra.mxu0 %v844
        %v883 = vpop.f32.mrf.mxu0
        %v884 = vadd.f32 0.0, %v883
        %v885 = vpop.f32.mrf.mxu0
        %v886 = vpop.f32.mrf.mxu0
        %v887 = vpop.f32.mrf.mxu0
        %888 = vdwg.mxu0
        %v889 = vpack.c.bf16 %v884, %v884
        %v891 = vunpack.c.l.b16 %v889
        %v892 = vpack.c.b16 %v891, %v891
        %893 = vrot.lane.b32.xlu0 %v892, 16
        %v894 = vpop.permute.xlu0 %893
        %vm896 = vcmask 191616
        %897 = vst.msk [vmem:[#allocation2] sm:$0xf] %vm896, %v894
        %898 = vrot.lane.b32.xlu0 %v415, 104
        %v899 = vpop.permute.xlu0 %898
        %900 = vrot.lane.b32.xlu0 %v481, 104
        %v901 = vpop.permute.xlu0 %900
        %v903 = vsel %vm548, %v899, 0
        %v906 = vsel %vm548, %v901, 0
        %908 = vmatprep.subr.bf16.mxu0 0
        %909 = vmatpush1.bf16.xpose.msra.mxu0 0
        %910 = vmatprep.subr.bf16.mxu0 0
        %911 = vmatpush1.bf16.xpose.msra.mxu0 0
        %912 = vmatprep.subr.bf16.mxu0 0
        %913 = vmatpush1.bf16.xpose.msra.mxu0 0
        %914 = vmatprep.subr.bf16.mxu0 0
        %915 = vmatpush1.bf16.xpose.msra.mxu0 0
        %916 = vmatprep.subr.bf16.mxu0 0
        %917 = vmatpush1.bf16.xpose.msra.mxu0 0
        %918 = vmatprep.subr.bf16.mxu0 0
        %919 = vmatpush1.bf16.xpose.msra.mxu0 0
        %920 = vmatprep.subr.bf16.mxu0 0
        %921 = vmatpush1.bf16.xpose.msra.mxu0 0
        %922 = vmatprep.subr.bf16.mxu0 0
        %923 = vmatpush1.bf16.xpose.msra.mxu0 %v906
        %924 = vmatprep.subr.bf16.mxu0 0
        %925 = vmatpush2.bf16.xpose.msra.mxu0 0
        %926 = vmatprep.subr.bf16.mxu0 0
        %927 = vmatpush2.bf16.xpose.msra.mxu0 0
        %928 = vmatprep.subr.bf16.mxu0 0
        %929 = vmatpush2.bf16.xpose.msra.mxu0 0
        %930 = vmatprep.subr.bf16.mxu0 0
        %931 = vmatpush2.bf16.xpose.msra.mxu0 0
        %932 = vmatprep.subr.bf16.mxu0 0
        %933 = vmatpush2.bf16.xpose.msra.mxu0 0
        %934 = vmatprep.subr.bf16.mxu0 0
        %935 = vmatpush2.bf16.xpose.msra.mxu0 0
        %936 = vmatprep.subr.bf16.mxu0 0
        %937 = vmatpush2.bf16.xpose.msra.mxu0 0
        %938 = vmatprep.subr.bf16.mxu0 0
        %939 = vmatpush2.bf16.xpose.msra.mxu0 0
        %940 = vmatprep.mubr.bf16.mxu0 0
        %941 = vmatmul.mubr.bf16.gmra.mxu0 %v903
        %v942 = vpop.f32.mrf.mxu0
        %v943 = vadd.f32 0.0, %v942
        %v944 = vpop.f32.mrf.mxu0
        %v945 = vpop.f32.mrf.mxu0
        %v946 = vpop.f32.mrf.mxu0
        %947 = vdwg.mxu0
        %v948 = vsel %vm548, %v943, -inf
        %949 = vmax.xlane.f32.xlu0 %v948
        %v950 = vpop.xlane.xlu0 %949
        %v951 = vsub.f32 %v943, %v950
        %v952 = vmul.f32 %v951, 1.442695
        %v953 = vpow.pop %v952
        %v954 = vsel %vm548, %v953, 0.0
        %955 = vadd.xlane.f32.xlu0 %v954
        %v956 = vpop.xlane.xlu0 %955
        %v957 = vrcp.pop %v956
        %v958 = vmul.f32 %v953, %v957
        %v959 = vpack.c.bf16 %v958, %v958
        %960 = vrot.lane.b32.xlu0 %v547, 104
        %v961 = vpop.permute.xlu0 %960
        %v963 = vsel %vm548, %v959, 0
        %v966 = vsel %vm610, %v961, 0
        %968 = vmatprep.subr.bf16.mxu0 0
        %969 = vmatpush1.bf16.msra.mxu0 0
        %970 = vmatprep.subr.bf16.mxu0 0
        %971 = vmatpush1.bf16.msra.mxu0 0
        %972 = vmatprep.subr.bf16.mxu0 0
        %973 = vmatpush1.bf16.msra.mxu0 0
        %974 = vmatprep.subr.bf16.mxu0 0
        %975 = vmatpush1.bf16.msra.mxu0 0
        %976 = vmatprep.subr.bf16.mxu0 0
        %977 = vmatpush1.bf16.msra.mxu0 0
        %978 = vmatprep.subr.bf16.mxu0 0
        %979 = vmatpush1.bf16.msra.mxu0 0
        %980 = vmatprep.subr.bf16.mxu0 0
        %981 = vmatpush1.bf16.msra.mxu0 0
        %982 = vmatprep.subr.bf16.mxu0 0
        %983 = vmatpush1.bf16.msra.mxu0 %v966
        %984 = vmatprep.subr.bf16.mxu0 0
        %985 = vmatpush2.bf16.msra.mxu0 0
        %986 = vmatprep.subr.bf16.mxu0 0
        %987 = vmatpush2.bf16.msra.mxu0 0
        %988 = vmatprep.subr.bf16.mxu0 0
        %989 = vmatpush2.bf16.msra.mxu0 0
        %990 = vmatprep.subr.bf16.mxu0 0
        %991 = vmatpush2.bf16.msra.mxu0 0
        %992 = vmatprep.subr.bf16.mxu0 0
        %993 = vmatpush2.bf16.msra.mxu0 0
        %994 = vmatprep.subr.bf16.mxu0 0
        %995 = vmatpush2.bf16.msra.mxu0 0
        %996 = vmatprep.subr.bf16.mxu0 0
        %997 = vmatpush2.bf16.msra.mxu0 0
        %998 = vmatprep.subr.bf16.mxu0 0
        %999 = vmatpush2.bf16.msra.mxu0 0
        %1000 = vmatprep.mubr.bf16.mxu0 0
        %1001 = vmatmul.mubr.bf16.gmra.mxu0 %v963
        %v1002 = vpop.f32.mrf.mxu0
        %v1003 = vadd.f32 0.0, %v1002
        %v1004 = vpop.f32.mrf.mxu0
        %v1005 = vpop.f32.mrf.mxu0
        %v1006 = vpop.f32.mrf.mxu0
        %1007 = vdwg.mxu0
        %v1008 = vpack.c.bf16 %v1003, %v1003
        %v1010 = vunpack.c.l.b16 %v1008
        %v1011 = vpack.c.b16 %v1010, %v1010
        %1012 = vrot.lane.b32.xlu0 %v1011, 24
        %v1013 = vpop.permute.xlu0 %1012
        %vm1015 = vcmask 257216
        %1016 = vst.msk [vmem:[#allocation2] sm:$0xf] %vm1015, %v1013
        %v1017 = vld [vmem:[#allocation2] sm:$0xf]
        %s1018 = scalar_lea.vmem [#allocation9], 48
        %v1019 = vld [vmem:[%s1018] sm:$0xf]
        %v1020 = vld [vmem:[%s1018 + $0x4] sm:$0xf]
        %v1021 = vld [vmem:[%s1018 + $0x8] sm:$0xf]
        %v1022 = vld [vmem:[%s1018 + $0xc] sm:$0xf]
        %v1023 = vld [vmem:[%s4 + $0x3] sm:$0x1]
        %v1024 = vlaneseq
        %v1025 = vshrl.u32 %v1024, 7
        %v1026 = vsub.s32 0, %v1025
        %v1027 = vrot.slane %v1023, %v1026
        %v1032 = vunpack.c.l.b16 %v1019
        %v1033 = vunpack.c.l.b16 %v1020
        %v1034 = vunpack.c.l.b16 %v1021
        %v1035 = vunpack.c.l.b16 %v1022
        %v1036 = vpack.c.b16 %v1033, %v1032
        %v1037 = vpack.c.b16 %v1035, %v1034
        %v1041 = vsel %vm371, %v1017, 0
        %1043 = vmatprep.subr.bf16.mxu0 0
        %1044 = vmatpush1.bf16.msra.mxu0 0
        %1045 = vmatprep.subr.bf16.mxu0 0
        %1046 = vmatpush1.bf16.msra.mxu0 0
        %1047 = vmatprep.subr.bf16.mxu0 0
        %1048 = vmatpush1.bf16.msra.mxu0 0
        %1049 = vmatprep.subr.bf16.mxu0 0
        %1050 = vmatpush1.bf16.msra.mxu0 0
        %1051 = vmatprep.subr.bf16.mxu0 0
        %1052 = vmatpush1.bf16.msra.mxu0 0
        %1053 = vmatprep.subr.bf16.mxu0 0
        %1054 = vmatpush1.bf16.msra.mxu0 0
        %1055 = vmatprep.subr.bf16.mxu0 0
        %1056 = vmatpush1.bf16.msra.mxu0 %v1037
        %1057 = vmatprep.subr.bf16.mxu0 0
        %1058 = vmatpush1.bf16.msra.mxu0 %v1036
        %1059 = vmatprep.subr.bf16.mxu0 0
        %1060 = vmatpush2.bf16.msra.mxu0 0
        %1061 = vmatprep.subr.bf16.mxu0 0
        %1062 = vmatpush2.bf16.msra.mxu0 0
        %1063 = vmatprep.subr.bf16.mxu0 0
        %1064 = vmatpush2.bf16.msra.mxu0 0
        %1065 = vmatprep.subr.bf16.mxu0 0
        %1066 = vmatpush2.bf16.msra.mxu0 0
        %1067 = vmatprep.subr.bf16.mxu0 0
        %1068 = vmatpush2.bf16.msra.mxu0 0
        %1069 = vmatprep.subr.bf16.mxu0 0
        %1070 = vmatpush2.bf16.msra.mxu0 0
        %1071 = vmatprep.subr.bf16.mxu0 0
        %1072 = vmatpush2.bf16.msra.mxu0 0
        %1073 = vmatprep.subr.bf16.mxu0 0
        %1074 = vmatpush2.bf16.msra.mxu0 0
        %1075 = vmatprep.mubr.bf16.mxu0 0
        %1076 = vmatmul.mubr.bf16.gmra.mxu0 %v1041
        %v1077 = vpop.f32.mrf.mxu0
        %v1078 = vadd.f32 %v1027, %v1077
        %v1079 = vpop.f32.mrf.mxu0
        %v1080 = vpop.f32.mrf.mxu0
        %v1081 = vpop.f32.mrf.mxu0
        %1082 = vdwg.mxu0
        %1083 = vst.msk [vmem:[%s342] sm:$0xff] %vm371, %v1078
        %s1084 = sand.u32 %s170, 1
        %s1085 = scalar_lea.sflag [#allocation5], %s1084
        %s1086 = sand.u32 %s170, 1
        %s1087 = smul.addr %s1086, 8
        %s1088 = scalar_lea.vmem [#allocation11], %s1087
        // Predicated region
        $region57: #{tpu_custom_call.1} parent=39 // pred_check
          %p1089 = pneg %p180
        $region58: #{tpu_custom_call.1} parent=39 // pred_check_branch
          %1091 = sbr.rel (%p1089) target = $region60
        $region59: #{tpu_custom_call.1} parent=39 // pred_region
          %s1093 = ssub.s32 128, 128
          %1094 = vsyncadd %s1085, %s1093
          %s1095 = sadd.s32 %s31, %s30
          %s1096 = smul.addr %s1095, 128
          %s1097 = scalar_lea.hbm %s5, %s1096
          %s1099 = sshll.u32 %s1088, 4
          %s1100 = int_to_ptr.vmem [resolvable:$true] %s1099
          %1102 = dma.vmem_to_hbm [thread:$0]  %s1100, 128, %s1097, %s1085
        $region60: #{tpu_custom_call.1} parent=39 // pred_fallthru
          _
      $region40: #{tpu_custom_call.1} parent=5 // pred_fallthru
        _
      %p1103 = scmp.le.s32.totalorder 2, %s21
      // Predicated region
      $region61: #{tpu_custom_call.1} parent=5 // pred_check
        %p1104 = pneg %p1103
      $region62: #{tpu_custom_call.1} parent=5 // pred_check_branch
        %1106 = sbr.rel (%p1104) target = $region64
      $region63: #{tpu_custom_call.1} parent=5 // pred_region
        %s1107 = ssub.s32 %s21, 2
        // Predicated region
        $region65: #{tpu_custom_call.1} parent=63 // pred_check
          %p1108 = pneg %p186
        $region66: #{tpu_custom_call.1} parent=63 // pred_check_branch
          %1110 = sbr.rel (%p1108) target = $region68
        $region67: #{tpu_custom_call.1} parent=63 // pred_region
          %s1111 = sand.u32 %s171, 1
          %s1112 = scalar_lea.sflag [#allocation5], %s1111
          %s1113 = sand.u32 %s171, 1
          %s1114 = smul.addr %s1113, 8
          %s1115 = scalar_lea.vmem [#allocation11], %s1114
          %1116 = dma.done %s1112, 128
        $region68: #{tpu_custom_call.1} parent=63 // pred_fallthru
          _
      $region64: #{tpu_custom_call.1} parent=5 // pred_fallthru
        _
    $region6: #{tpu_custom_call.1} parent=1 // loop_footer
      %s25 = sadd.s32 1, %s21
    $region7: #{tpu_custom_call.1} parent=1 // loop_footer_branch
      %20 = sbr.rel target = $region3
    $region8: #{tpu_custom_call.1} parent=1 // loop_exit
      _
    %1117 = vsyncpa [#allocation4], 1
    %s1118 = scalar_lea.sflag [#allocation4], 1
    %1119 = vsyncpa %s1118, 1
    %1120 = vsyncpa [#allocation7], 1
    %s1121 = scalar_lea.sflag [#allocation7], 1
    %1122 = vsyncpa %s1121, 1
    %1123 = vsyncpa [#allocation10], 1
    %1124 = vsyncpa [#allocation5], 1
    %s1125 = scalar_lea.sflag [#allocation5], 1
    %1126 = vsyncpa %s1125, 1

</llo_original>
